<compile_context>
chip_gen: v5e
topology: v5e:2x2
jax: 0.10.0
libtpu: 0.0.40
codegen_flags: <defaults>
</compile_context>

<pallas_src>
import math
import jax
import jax.numpy as jnp
from jax.experimental import pallas as pl
from jax.experimental.pallas import tpu as pltpu

SEQ = 8        # seq_len  (L)
BATCH = 2      # batch    (N)
EMSIZE = 32    # d_model  (E)
MAX_LEN = 64   # pe buffer length (only pe[:SEQ] is used, matching the module)
LANES = 128


def make_pe_table(max_len: int, d_model: int) -> jnp.ndarray:
    """Matches PyTorch: pe[pos, 0, 0::2] = sin(pos*div), pe[pos, 0, 1::2] = cos(pos*div)."""
    position = jnp.arange(max_len, dtype=jnp.float32)[:, None]              # (max_len, 1)
    div_term = jnp.exp(jnp.arange(0, d_model, 2, dtype=jnp.float32)
                       * (-math.log(10000.0) / d_model))                    # (d_model//2,)
    ang = position * div_term                                               # (max_len, d_model//2)
    pe = jnp.stack([jnp.sin(ang), jnp.cos(ang)], axis=-1)                   # interleave sin/cos
    return pe.reshape(max_len, 1, d_model)                                  # (max_len, 1, d_model)


def pe_add_kernel(x_ref, pe_ref, o_ref):
    # Single grid step; fully lane-dense (last dim = 128) elementwise add on the VPU.
    o_ref[...] = x_ref[...] + pe_ref[...]


def positional_encoding(x_lne: jnp.ndarray, pe_table: jnp.ndarray) -> jnp.ndarray:
    """x_lne: (L, N, E); pe_table: (max_len, 1, E). Returns x + pe[:L] (dropout = identity)."""
    L, N, E = x_lne.shape
    # Broadcast the (L, 1, E) buffer over batch on the host (one-time, cheap XLA op).
    pe_b = jnp.broadcast_to(pe_table[:L], (L, N, E)).astype(x_lne.dtype)

    total = L * N * E
    if total % LANES == 0:
        rows, cols = total // LANES, LANES   # lane-dense: unmasked 128-wide loads/stores
    else:
        rows, cols = L, N * E                # fallback layout for odd sizes
    x2 = x_lne.reshape(rows, cols)
    pe2 = pe_b.reshape(rows, cols)

    out = pl.pallas_call(
        pe_add_kernel,
        out_shape=jax.ShapeDtypeStruct((rows, cols), x_lne.dtype),
        grid=(1,),
        in_specs=[pl.BlockSpec((rows, cols), lambda i: (0, 0)),
                  pl.BlockSpec((rows, cols), lambda i: (0, 0))],
        out_specs=pl.BlockSpec((rows, cols), lambda i: (0, 0)),
        compiler_params=pltpu.CompilerParams(dimension_semantics=("arbitrary",)),
    )(x2, pe2)

    # TODO(synk): nn.Dropout(p=0.1) omitted — eval/inference semantics (identity).
    # Training-mode dropout would use pltpu.prng_seed + pltpu.stateful_bernoulli in-kernel.
    return out.reshape(L, N, E)


if __name__ == "__main__":
    key = jax.random.PRNGKey(0)
    x = jax.random.normal(key, (SEQ, BATCH, EMSIZE), jnp.float32)  # (L, N, E)
    pe_table = make_pe_table(MAX_LEN, EMSIZE)

    out = jax.block_until_ready(positional_encoding(x, pe_table))

    # Pure-JAX reference of the PyTorch forward (eval mode): x + pe[:L]
    ref = x + pe_table[:SEQ]

    assert out.shape == (SEQ, BATCH, EMSIZE)
    assert jnp.allclose(out, ref, atol=1e-6, rtol=1e-6), "mismatch vs reference"
    print("KERNEL_OK")
</pallas_src>

<mosaic_0001>
module attributes {stable_mosaic.version = 11 : i64} {
  func.func @pe_add_kernel(%arg0: i32, %arg1: memref<4x128xf32, #tpu.memory_space<vmem>>, %arg2: memref<4x128xf32, #tpu.memory_space<vmem>>, %arg3: memref<4x128xf32, #tpu.memory_space<vmem>>) attributes {dimension_semantics = [#tpu.dimension_semantics<arbitrary>], iteration_bounds = array<i64: 1>, scalar_prefetch = 0 : i64, scratch_operands = 0 : i64, tpu.core_type = #tpu.core_type<tc>, window_params = [{pipeline_mode = #tpu.pipeline_mode<synchronous>, transform_indices = @transform_0, window_bounds = array<i64: 4, 128>}, {pipeline_mode = #tpu.pipeline_mode<synchronous>, transform_indices = @transform_1, window_bounds = array<i64: 4, 128>}, {pipeline_mode = #tpu.pipeline_mode<synchronous>, transform_indices = @transform_2, window_bounds = array<i64: 4, 128>}]} {
    %c0 = arith.constant 0 : index
    %c0_0 = arith.constant 0 : index
    %0 = vector.load %arg1[%c0, %c0_0] : memref<4x128xf32, #tpu.memory_space<vmem>>, vector<4x128xf32>
    %c0_1 = arith.constant 0 : index
    %c0_2 = arith.constant 0 : index
    %1 = vector.load %arg2[%c0_1, %c0_2] : memref<4x128xf32, #tpu.memory_space<vmem>>, vector<4x128xf32>
    %2 = arith.addf %0, %1 : vector<4x128xf32>
    %c0_3 = arith.constant 0 : index
    %c0_4 = arith.constant 0 : index
    %3 = vector.load %arg3[%c0_3, %c0_4] : memref<4x128xf32, #tpu.memory_space<vmem>>, vector<4x128xf32>
    tpu.vector_store %arg3[%c0_3, %c0_4], %2 {strides = array<i32>} : memref<4x128xf32, #tpu.memory_space<vmem>>, vector<4x128xf32>,
    return
  }
  func.func @transform_0(%arg0: i32) -> (i32, i32) {
    %c0_i32 = arith.constant 0 : i32
    %c0_i32_0 = arith.constant 0 : i32
    %c0_i32_1 = arith.constant 0 : i32
    return %c0_i32, %c0_i32_0 : i32, i32
  }
  func.func @transform_1(%arg0: i32) -> (i32, i32) {
    %c0_i32 = arith.constant 0 : i32
    %c0_i32_0 = arith.constant 0 : i32
    %c0_i32_1 = arith.constant 0 : i32
    return %c0_i32, %c0_i32_0 : i32, i32
  }
  func.func @transform_2(%arg0: i32) -> (i32, i32) {
    %c0_i32 = arith.constant 0 : i32
    %c0_i32_0 = arith.constant 0 : i32
    %c0_i32_1 = arith.constant 0 : i32
    return %c0_i32, %c0_i32_0 : i32, i32
  }
}

</mosaic_0001>

<llo_original>
// kernel: tpu_custom_call.1
$region0: #{tpu_custom_call.1}
  #allocation0 [shape = 'u32[]', space=smem, size = 0x4, offset = 0x4, fixed_abs, tag = 'smem constant byte address 0x4 - core index']
  #allocation1 [shape = 'u32[72,128]{1,0:T(1,128)}', space=vmem, size = 0x9000, scoped, tag = 'internal scratch']
  %s0 = inlined_call_operand.hbm [shape: f32[4,128], index: 0, kind: input, shape index: {}]
  %s1 = inlined_call_operand.hbm [shape: f32[4,128], index: 1, kind: input, shape index: {}]
  %s2 = inlined_call_operand.hbm [shape: f32[4,128], index: 2, kind: output, shape index: {}]
  %s3 = sld [smem:[#allocation0]]
  $region26: #{tpu_custom_call.1} parent=0
    _
  %s5 = ssub.s32 1, %s3
  %s6 = scalar_select 0, %s5, %s3
  $region1: #{tpu_custom_call.1} parent=0
    #allocation2 [shape = 'u8[2048]{0}', space=vmem, size = 0x800, scoped, tag = 'input window, operand 0, single buffered']
    #allocation3 [shape = 's32[1]{0}', space=sflag, size = 0x4, scoped, tag = 'scoped memory for tpu_custom_call.1']
    #allocation4 [shape = 's32[1]{0}', space=sflag, size = 0x4, scoped, tag = 'scoped memory for tpu_custom_call.1']
    #allocation5 [shape = 'u8[2048]{0}', space=vmem, size = 0x800, scoped, tag = 'input window, operand 1, single buffered']
    #allocation6 [shape = 's32[1]{0}', space=sflag, size = 0x4, scoped, tag = 'scoped memory for tpu_custom_call.1']
    #allocation7 [shape = 'u8[2048]{0}', space=vmem, size = 0x800, scoped, tag = 'output window, operand 0, single buffered']
    %7 = vsyncpa [#allocation3], 0
    %8 = vsyncpa [#allocation6], 0
    %9 = vsyncpa [#allocation4], 0
    // Predicated region
    $region2: #{tpu_custom_call.1} parent=1 // pred_check
      _
    $region3: #{tpu_custom_call.1} parent=1 // pred_check_branch
      %11 = sbr.rel (0) target = $region5
    $region4: #{tpu_custom_call.1} parent=1 // pred_region
      %13 = vsyncadd [#allocation3], 0
      %s15 = sshll.u32 %s0, 4
      %s16 = int_to_ptr.hbm [resolvable:$true] %s15
      %s17 = sshll.u32 [#allocation2], 4
      %s18 = int_to_ptr.vmem [resolvable:$true] %s17
      %20 = dma.hbm_to_vmem [thread:$0]  %s16, 64, %s18, [#allocation3]
    $region5: #{tpu_custom_call.1} parent=1 // pred_fallthru
      _
    // Predicated region
    $region6: #{tpu_custom_call.1} parent=1 // pred_check
      _
    $region7: #{tpu_custom_call.1} parent=1 // pred_check_branch
      %22 = sbr.rel (0) target = $region9
    $region8: #{tpu_custom_call.1} parent=1 // pred_region
      %24 = vsyncadd [#allocation6], 0
      %s26 = sshll.u32 %s1, 4
      %s27 = int_to_ptr.hbm [resolvable:$true] %s26
      %s28 = sshll.u32 [#allocation5], 4
      %s29 = int_to_ptr.vmem [resolvable:$true] %s28
      %31 = dma.hbm_to_vmem [thread:$0]  %s27, 64, %s29, [#allocation6]
    $region9: #{tpu_custom_call.1} parent=1 // pred_fallthru
      _
    // Predicated region
    $region10: #{tpu_custom_call.1} parent=1 // pred_check
      _
    $region11: #{tpu_custom_call.1} parent=1 // pred_check_branch
      %33 = sbr.rel (0) target = $region13
    $region12: #{tpu_custom_call.1} parent=1 // pred_region
      %35 = dma.done [#allocation3], 64
    $region13: #{tpu_custom_call.1} parent=1 // pred_fallthru
      _
    // Predicated region
    $region14: #{tpu_custom_call.1} parent=1 // pred_check
      _
    $region15: #{tpu_custom_call.1} parent=1 // pred_check_branch
      %37 = sbr.rel (0) target = $region17
    $region16: #{tpu_custom_call.1} parent=1 // pred_region
      %39 = dma.done [#allocation6], 64
    $region17: #{tpu_custom_call.1} parent=1 // pred_fallthru
      _
    %v40 = vld [vmem:[#allocation2] sm:$0xf]
    %v41 = vld [vmem:[#allocation5] sm:$0xf]
    %v42 = vadd.f32 %v40, %v41
    %43 = vst [vmem:[#allocation7] sm:$0xf] %v42
    // Predicated region
    $region18: #{tpu_custom_call.1} parent=1 // pred_check
      _
    $region19: #{tpu_custom_call.1} parent=1 // pred_check_branch
      %45 = sbr.rel (0) target = $region21
    $region20: #{tpu_custom_call.1} parent=1 // pred_region
      %47 = vsyncadd [#allocation4], 0
      %s49 = sshll.u32 [#allocation7], 4
      %s50 = int_to_ptr.vmem [resolvable:$true] %s49
      %s51 = sshll.u32 %s2, 4
      %s52 = int_to_ptr.hbm [resolvable:$true] %s51
      %54 = dma.vmem_to_hbm [thread:$0]  %s50, 64, %s52, [#allocation4]
    $region21: #{tpu_custom_call.1} parent=1 // pred_fallthru
      _
    // Predicated region
    $region22: #{tpu_custom_call.1} parent=1 // pred_check
      _
    $region23: #{tpu_custom_call.1} parent=1 // pred_check_branch
      %56 = sbr.rel (0) target = $region25
    $region24: #{tpu_custom_call.1} parent=1 // pred_region
      %58 = dma.done [#allocation4], 64
    $region25: #{tpu_custom_call.1} parent=1 // pred_fallthru
      _
    %59 = vsyncpa [#allocation3], 1
    %60 = vsyncpa [#allocation6], 1
    %61 = vsyncpa [#allocation4], 1

</llo_original>
